<compile_context>
chip_gen: v7x
topology: tpu7x:2x2x1
jax: 0.10.0
libtpu: 0.0.40
codegen_flags: <defaults>
</compile_context>

<pallas_src>
import functools

import jax
import jax.numpy as jnp
import numpy as np
from jax.experimental import pallas as pl
from jax.experimental.pallas import tpu as pltpu

EPS = 1e-07


def _pick_pack_factor(bsz: int, K: int) -> int:
    """Rows packed per tile row: largest divisor g of bsz with g*K <= 128 and bsz//g >= 8."""
    gmax = min(max(1, 128 // K), max(1, bsz // 8))
    g = 1
    for cand in range(2, gmax + 1):
        if bsz % cand == 0:
            g = cand
    return g


def _vmem_budget():
    """(per-input-tile byte budget, vmem_limit_bytes or None) from the actual chip."""
    try:
        cap = int(pltpu.get_tpu_info().vmem_capacity_bytes)
        if cap <= 0:
            raise ValueError(cap)
    except Exception:
        return 4 * 1024 * 1024, None  # unknown chip / interpret: stay inside defaults
    # Double-buffered input (2 x tile) + tiny outputs stay well inside the raised limit:
    #   v5e/v6e (128 MiB VMEM) -> 16 MiB tiles, 96 MiB limit
    #   v7x     ( 64 MiB VMEM) -> ~10 MiB tiles, 48 MiB limit
    tile_cap = max(1 << 20, min(16 * 1024 * 1024, cap // 6))
    return tile_cap, (cap * 3) // 4


def _make_kernel(c_num: float, c_den: float, use_matmul: bool):
    def kernel(posmask_ref, red_ref, x_ref, out_ref):
        x = x_ref[...].astype(jnp.float32)                 # (TB, Kp)
        is_pos = posmask_ref[...] > 0.5                    # (1, Kp), broadcasts over rows
        num = jnp.where(is_pos, x, c_num)
        # one divide + ONE log per element fuses the log_D1 / log_D0 branches
        lr = jnp.log(num / (x + c_den))                    # (TB, Kp)
        if use_matmul:
            # Block-diagonal weight matrix folds the "positive->1 / negative->P"
            # weighting AND the per-original-row segment reduction into a single
            # pass on the otherwise-idle MXU (exact f32 via HIGHEST precision).
            out_ref[...] = jax.lax.dot_general(
                lr, red_ref[...],
                dimension_numbers=(((1,), (0,)), ((), ())),
                precision=jax.lax.Precision.HIGHEST,
                preferred_element_type=jnp.float32)        # (TB, g)
        else:
            # Unpacked path (K >= 128 or no usable divisor): weighted lane reduce.
            out_ref[...] = jnp.sum(lr * red_ref[...], axis=1, keepdims=True)  # (TB, 1)
    return kernel


@functools.partial(jax.jit,
                   static_argnames=("P", "n_data", "sample_KD", "tile_cap_bytes"))
def contrast_loss_v2(x, P, n_data, sample_KD, tile_cap_bytes=None):
    """x: (bsz, P+N, 1). Returns a scalar (sample_KD='False') or (bsz,) ('True')."""
    bsz, K, _ = x.shape
    N = K - P
    c = float(N) / float(n_data)                           # m * Pn

    # --- small-K lane packing: view (bsz, K) as (bsz/g, g*K); free, contiguous ---
    g = _pick_pack_factor(bsz, K)
    Kp, bszp = g * K, bsz // g
    x2 = x.reshape(bszp, Kp)                               # keep input dtype; cast in-kernel

    # --- tiny constant tables (same block every step -> resident in VMEM) ---
    cols = np.arange(Kp)
    in_pos = (cols % K) < P
    posmask = jnp.asarray(in_pos.astype(np.float32).reshape(1, Kp))
    w = np.where(in_pos, 1.0, float(P)).astype(np.float32)  # positives 1, negatives P
    use_matmul = g > 1
    if use_matmul:
        wmat = np.zeros((Kp, g), np.float32)
        wmat[cols, cols // K] = w
        red = jnp.asarray(wmat)
        red_spec = pl.BlockSpec((Kp, g), lambda i: (0, 0))
    else:
        red = jnp.asarray(w.reshape(1, Kp))
        red_spec = pl.BlockSpec((1, Kp), lambda i: (0, 0))

    # --- generation-aware row tiling: no hard row cap, no padding copy ---
    auto_cap, vmem_limit = _vmem_budget()
    tile_cap = int(tile_cap_bytes) if tile_cap_bytes is not None else auto_cap
    itemsize = jnp.dtype(x2.dtype).itemsize
    sub = {1: 32, 2: 16, 4: 8}.get(itemsize, 8)            # packed-sublane granularity
    rows_cap = max(sub, (tile_cap // (Kp * itemsize)) // sub * sub)
    if bszp <= rows_cap:
        TB, ntiles = bszp, 1                               # full-dim block, no alignment pad
    else:
        TB, ntiles = rows_cap, int(pl.cdiv(bszp, rows_cap))
    out_rows = ntiles * TB
    # NOTE: when TB does not divide bszp the last input block is partial; its
    # out-of-bounds rows only affect their own per-row outputs, sliced off below.

    cost = pl.CostEstimate(
        flops=out_rows * Kp * (6 + (2 * g if use_matmul else 2)),
        transcendentals=out_rows * Kp,
        bytes_accessed=out_rows * Kp * itemsize + out_rows * g * 4,
    )
    cparams = {"dimension_semantics": ("parallel",)}
    if vmem_limit is not None:
        cparams["vmem_limit_bytes"] = int(vmem_limit)

    out = pl.pallas_call(
        _make_kernel(c, c + EPS, use_matmul),
        out_shape=jax.ShapeDtypeStruct((out_rows, g), jnp.float32),
        grid=(ntiles,),
        in_specs=[pl.BlockSpec((1, Kp), lambda i: (0, 0)),    # positive-column mask
                  red_spec,                                   # weight row / weight matrix
                  pl.BlockSpec((TB, Kp), lambda i: (i, 0))],  # data tiles
        out_specs=pl.BlockSpec((TB, g), lambda i: (i, 0)),
        compiler_params=pltpu.CompilerParams(**cparams),
        cost_estimate=cost,
    )(posmask, red, x2)

    # TODO(synk): the (TB, g) per-tile output is not relaid out to a lane-dense
    # (1, TB*g) slab in-kernel; after lane packing it is <= ~10% of the streamed
    # input bytes, so the extra XLU relayout was not worth the lowering risk.
    row_sums = out.reshape(-1)[:bsz]        # per-sample: sum_p logD1 + P * sum_n logD0
    if sample_KD == 'False':
        return -jnp.sum(row_sums) / (float(bsz) * float(P))
    return -row_sums / float(P)


def _reference(x, P, n_data, sample_KD):
    """Pure-JAX transcription of the PyTorch forward."""
    x = x.astype(jnp.float32)
    bsz = x.shape[0]
    N = x.shape[1] - P
    m = N
    Pn = 1.0 / float(n_data)
    P_pos = x[:, :P]                                   # (bsz, P, 1)
    log_D1 = jnp.log(P_pos / (P_pos + m * Pn + EPS))
    P_neg = x[:, P:]                                   # (bsz, N, 1)
    log_D0 = jnp.log((m * Pn) / (P_neg + m * Pn + EPS))
    if sample_KD == 'False':
        loss = -((jnp.squeeze(log_D1).sum(0)
                  + jnp.tile(log_D0.reshape(-1, 1), (1, P)).sum(0)) / bsz).sum(0) / P
    else:
        loss = -(jnp.squeeze(log_D1, -1)
                 + jnp.tile(log_D0, (1, 1, P)).sum(1)).sum(1) / P
    return loss


if __name__ == "__main__":
    key = jax.random.PRNGKey(0)
    n_data = 100
    ok = True

    # (bsz, P, N, tile_cap_override) — covers: tiny full-dim blocks, the packed
    # small-K MXU path (g in {2,4}), a multi-tile grid whose last block is
    # partial (no padding copy), and a K>=128 unpacked multi-tile grid.
    cases = [
        (4, 3, 8, None),          # K=11,  g=1, grid=1
        (20, 2, 30, None),        # K=32,  g=2, grid=1
        (64, 2, 30, None),        # K=32,  g=4, grid=1
        (300, 2, 30, 16 * 1024),  # K=32,  g=4, grid=3 (partial last block)
        (40, 3, 130, 8 * 1024),   # K=133, g=1, grid=5
    ]
    for bsz, P, N, cap in cases:
        key, k = jax.random.split(key)
        # CRD scores are positive similarities; keep them positive, away from 0.
        x = jax.random.uniform(k, (bsz, P + N, 1), minval=0.05, maxval=1.0,
                               dtype=jnp.float32)
        for mode in ('False', 'True'):
            got = jax.block_until_ready(
                contrast_loss_v2(x, P, n_data, mode, tile_cap_bytes=cap))
            want = jax.block_until_ready(_reference(x, P, n_data, mode))
            if not np.allclose(np.asarray(got), np.asarray(want),
                               rtol=1e-5, atol=1e-5):
                ok = False
                print(f"MISMATCH bsz={bsz} P={P} N={N} mode={mode}: "
                      f"got={got} want={want}")

    if ok:
        print("KERNEL_OK")
</pallas_src>

<mosaic_0001>
module attributes {stable_mosaic.version = 11 : i64} {
  func.func @kernel(%arg0: i32, %arg1: memref<1x11xf32, #tpu.memory_space<vmem>>, %arg2: memref<1x11xf32, #tpu.memory_space<vmem>>, %arg3: memref<4x11xf32, #tpu.memory_space<vmem>>, %arg4: memref<4x1xf32, #tpu.memory_space<vmem>>) attributes {dimension_semantics = [#tpu.dimension_semantics<parallel>], iteration_bounds = array<i64: 1>, scalar_prefetch = 0 : i64, scratch_operands = 0 : i64, tpu.core_type = #tpu.core_type<tc>, window_params = [{pipeline_mode = #tpu.pipeline_mode<synchronous>, transform_indices = @transform_0, window_bounds = array<i64: 1, 11>}, {pipeline_mode = #tpu.pipeline_mode<synchronous>, transform_indices = @transform_1, window_bounds = array<i64: 1, 11>}, {transform_indices = @transform_2, window_bounds = array<i64: 4, 11>}, {transform_indices = @transform_3, window_bounds = array<i64: 4, 1>}]} {
    %c0 = arith.constant 0 : index
    %c0_0 = arith.constant 0 : index
    %0 = vector.load %arg3[%c0, %c0_0] : memref<4x11xf32, #tpu.memory_space<vmem>>, vector<4x11xf32>
    %c0_1 = arith.constant 0 : index
    %c0_2 = arith.constant 0 : index
    %1 = vector.load %arg1[%c0_1, %c0_2] : memref<1x11xf32, #tpu.memory_space<vmem>>, vector<1x11xf32>
    %cst = arith.constant 5.000000e-01 : f32
    %2 = vector.broadcast %cst : f32 to vector<1x11xf32>
    %3 = arith.cmpf ogt, %1, %2 : vector<1x11xf32>
    %cst_3 = arith.constant 8.000000e-02 : f32
    %4 = vector.shape_cast %3 : vector<1x11xi1> to vector<1x11xi1>
    %5 = vector.broadcast %4 : vector<1x11xi1> to vector<4x11xi1>
    %6 = vector.broadcast %cst_3 : f32 to vector<4x11xf32>
    %7 = arith.select %5, %0, %6 : vector<4x11xi1>, vector<4x11xf32>
    %cst_4 = arith.constant 8.000010e-02 : f32
    %8 = vector.broadcast %cst_4 : f32 to vector<4x11xf32>
    %9 = arith.addf %0, %8 : vector<4x11xf32>
    %10 = arith.divf %7, %9 : vector<4x11xf32>
    %11 = math.log %10 : vector<4x11xf32>
    %c0_5 = arith.constant 0 : index
    %c0_6 = arith.constant 0 : index
    %12 = vector.load %arg2[%c0_5, %c0_6] : memref<1x11xf32, #tpu.memory_space<vmem>>, vector<1x11xf32>
    %13 = vector.broadcast %12 : vector<1x11xf32> to vector<4x11xf32>
    %14 = arith.mulf %11, %13 : vector<4x11xf32>
    %cst_7 = arith.constant dense<0.000000e+00> : vector<4xf32>
    %15 = vector.multi_reduction <add>, %14, %cst_7 [1] : vector<4x11xf32> to vector<4xf32>
    %16 = vector.shape_cast %15 : vector<4xf32> to vector<4x1xf32>
    %c0_8 = arith.constant 0 : index
    %c0_9 = arith.constant 0 : index
    %17 = vector.load %arg4[%c0_8, %c0_9] : memref<4x1xf32, #tpu.memory_space<vmem>>, vector<4x1xf32>
    tpu.vector_store %arg4[%c0_8, %c0_9], %16 {strides = array<i32>} : memref<4x1xf32, #tpu.memory_space<vmem>>, vector<4x1xf32>,
    return
  }
  func.func @transform_0(%arg0: i32) -> (i32, i32) {
    %c0_i32 = arith.constant 0 : i32
    %c0_i32_0 = arith.constant 0 : i32
    %c0_i32_1 = arith.constant 0 : i32
    return %c0_i32, %c0_i32_0 : i32, i32
  }
  func.func @transform_1(%arg0: i32) -> (i32, i32) {
    %c0_i32 = arith.constant 0 : i32
    %c0_i32_0 = arith.constant 0 : i32
    %c0_i32_1 = arith.constant 0 : i32
    return %c0_i32, %c0_i32_0 : i32, i32
  }
  func.func @transform_2(%arg0: i32) -> (i32, i32) {
    %c0_i32 = arith.constant 0 : i32
    %c0_i32_0 = arith.constant 0 : i32
    return %arg0, %c0_i32 : i32, i32
  }
  func.func @transform_3(%arg0: i32) -> (i32, i32) {
    %c0_i32 = arith.constant 0 : i32
    %c0_i32_0 = arith.constant 0 : i32
    return %arg0, %c0_i32 : i32, i32
  }
}

</mosaic_0001>

<llo_original>
// kernel: contrast_loss_v2.1
$region0: #{contrast_loss_v2.1}
  #allocation0 [shape = 'u32[]', space=smem, size = 0x4, offset = 0x4, fixed_abs, tag = 'smem constant byte address 0x4 - core index']
  #allocation1 [shape = 'u32[144,128]{1,0:T(1,128)}', space=vmem, size = 0x12000, scoped, tag = 'internal scratch']
  %s0 = inlined_call_operand.vmem [shape: f32[1,11], index: 0, kind: input, shape index: {}]
  %s1 = inlined_call_operand.vmem [shape: f32[1,11], index: 1, kind: input, shape index: {}]
  %s2 = inlined_call_operand.hbm [shape: f32[4,11], index: 2, kind: input, shape index: {}]
  %s3 = inlined_call_operand.vmem [shape: f32[4,1], index: 3, kind: output, shape index: {}]
  %s4 = sld [smem:[#allocation0]]
  $region26: #{contrast_loss_v2.1} parent=0
    _
  %s6 = ssub.s32 1, %s4
  %s7 = scalar_select 0, %s6, %s4
  $region1: #{contrast_loss_v2.1} parent=0
    #allocation2 [shape = 'u8[2048]{0}', space=vmem, size = 0x800, scoped, tag = 'input window, operand 2, single buffered']
    #allocation3 [shape = 's32[1]{0}', space=sflag, size = 0x4, scoped, tag = 'scoped memory for contrast_loss_v2.1']
    %8 = vsyncpa [#allocation3], 0
    // Predicated region
    $region2: #{contrast_loss_v2.1} parent=1 // pred_check
      _
    $region3: #{contrast_loss_v2.1} parent=1 // pred_check_branch
      %10 = sbr.rel (0) target = $region5
    $region4: #{contrast_loss_v2.1} parent=1 // pred_region
      _
    $region5: #{contrast_loss_v2.1} parent=1 // pred_fallthru
      _
    // Predicated region
    $region6: #{contrast_loss_v2.1} parent=1 // pred_check
      _
    $region7: #{contrast_loss_v2.1} parent=1 // pred_check_branch
      %12 = sbr.rel (0) target = $region9
    $region8: #{contrast_loss_v2.1} parent=1 // pred_region
      _
    $region9: #{contrast_loss_v2.1} parent=1 // pred_fallthru
      _
    // Predicated region
    $region10: #{contrast_loss_v2.1} parent=1 // pred_check
      _
    $region11: #{contrast_loss_v2.1} parent=1 // pred_check_branch
      %14 = sbr.rel (0) target = $region13
    $region12: #{contrast_loss_v2.1} parent=1 // pred_region
      %s16 = ssub.s32 64, 64
      %17 = vsyncadd [#allocation3], %s16
      %s19 = sshll.u32 [#allocation2], 4
      %s20 = int_to_ptr.vmem [resolvable:$true] %s19
      %22 = dma.hbm_to_vmem [thread:$0]  %s2, 64, %s20, [#allocation3]
    $region13: #{contrast_loss_v2.1} parent=1 // pred_fallthru
      _
    // Predicated region
    $region14: #{contrast_loss_v2.1} parent=1 // pred_check
      _
    $region15: #{contrast_loss_v2.1} parent=1 // pred_check_branch
      %24 = sbr.rel (0) target = $region17
    $region16: #{contrast_loss_v2.1} parent=1 // pred_region
      %25 = dma.done [#allocation3], 64
    $region17: #{contrast_loss_v2.1} parent=1 // pred_fallthru
      _
    %v26 = vld [vmem:[#allocation2] sm:$0xf]
    %v27 = vld [vmem:[%s0] sm:$0x1]
    %vm28 = vcmp.gt.f32.partialorder %v27, 0.5
    %v29 = vsel %vm28, 1, 0
    %v30 = vlaneseq
    %v31 = vshrl.u32 %v30, 7
    %v32 = vsub.s32 0, %v31
    %v33 = vrot.slane %v29, %v32
    %vm34 = vcmp.eq.s32.totalorder %v33, 1
    %v35 = vsel %vm34, %v26, 0.08
    %v36 = vadd.f32 %v26, 0.0800001
    %v37 = vrcp.pop %v36
    %v38 = vmul.f32 %v35, %v37
    %v39 = vlog2.pop %v38
    %v40 = vmul.f32 %v39, 0.6931472
    %v41 = vld [vmem:[%s1] sm:$0x1]
    %v43 = vlaneseq
    %v44 = vshrl.u32 %v43, 7
    %v45 = vsub.s32 0, %v44
    %v46 = vrot.slane %v41, %v45
    %v48 = vmul.f32 %v40, %v46
    %vm49 = vcmask 84992
    %v50 = vsel %vm49, %v48, 0.0
    %51 = vadd.xlane.f32.xlu0 %v50
    %v52 = vpop.xlane.xlu0 %51
    %vm53 = vcmask 3072
    %54 = vst.msk [vmem:[%s3] sm:$0xf] %vm53, %v52
    // Predicated region
    $region18: #{contrast_loss_v2.1} parent=1 // pred_check
      _
    $region19: #{contrast_loss_v2.1} parent=1 // pred_check_branch
      %56 = sbr.rel (0) target = $region21
    $region20: #{contrast_loss_v2.1} parent=1 // pred_region
      _
    $region21: #{contrast_loss_v2.1} parent=1 // pred_fallthru
      _
    // Predicated region
    $region22: #{contrast_loss_v2.1} parent=1 // pred_check
      _
    $region23: #{contrast_loss_v2.1} parent=1 // pred_check_branch
      %58 = sbr.rel (0) target = $region25
    $region24: #{contrast_loss_v2.1} parent=1 // pred_region
      _
    $region25: #{contrast_loss_v2.1} parent=1 // pred_fallthru
      _
    %59 = vsyncpa [#allocation3], 1

</llo_original>
